<compile_context>
chip_gen: v5e
topology: v5e:2x2
jax: 0.10.0
libtpu: 0.0.40
codegen_flags: <defaults>
</compile_context>

<pallas_src>
import jax
import jax.numpy as jnp
from jax.experimental import pallas as pl
from jax.experimental.pallas import tpu as pltpu

CLIP = 0.1        # GRPO clip_range
NEG_INF = -1e30   # finite large-negative (avoids inf-inf / inf*0)


def _round_up(a, b):
    return ((a + b - 1) // b) * b


def _physical_vmem_bytes():
    try:
        return int(pltpu.get_tpu_info().vmem_capacity_bytes)
    except Exception:
        return 64 * 1024 * 1024        # v7x floor; safe on every generation


def _choose_tiles(n, h, v, m_tile_req, v_tile_req, budget):
    """Pick (m_tile, v_tile) under a VMEM byte budget.

    m_tile determines W HBM-traffic intensity so it is shrunk last; v_tile
    prefers a divisor of V (multiple of 128) so no padded vocab columns exist.
    """
    v_tile = min(_round_up(v_tile_req, 128), _round_up(v, 128))
    if v % v_tile:
        for cand in range(v_tile, 0, -128):
            if v % cand == 0:
                v_tile = cand
                break
    m_tile = _round_up(min(m_tile_req, _round_up(n, 16)), 16)

    def footprint(mt, vt):
        x_b = 2 * mt * h * 2            # double-buffered bf16 activation tile
        w_b = 2 * h * vt * 2            # double-buffered bf16 W tile
        tok_b = 2 * mt * 128 * 4        # packed per-token scalars (lane-padded)
        out_b = 2 * 2 * mt * 128 * 4    # two (mt,1) f32 outputs, double-buffered
        scr_b = 3 * mt * 128 * 4        # online-softmax scratch
        log_b = 2 * mt * vt * 4         # f32 logits tile + temporaries headroom
        return x_b + w_b + tok_b + out_b + scr_b + log_b

    while footprint(m_tile, v_tile) > budget and v_tile > 256:
        v_tile = max(256, _round_up(v_tile // 2, 128))
    while footprint(m_tile, v_tile) > budget and m_tile > 16:
        m_tile = max(16, _round_up(m_tile // 2, 16))
    return m_tile, v_tile


def _make_grpo_kernel(v_actual, v_pad, clip):
    vocab_is_padded = (v_pad != v_actual)

    def kernel(x_ref, w_ref, tok_ref, ploss_ref, kl_ref, m_scr, l_scr, g_scr):
        v = pl.program_id(1)
        last_v = pl.num_programs(1) - 1

        # ---- init streaming state on the first vocab tile ----
        @pl.when(v == 0)
        def _():
            m_scr[...] = jnp.full_like(m_scr, NEG_INF)
            l_scr[...] = jnp.zeros_like(l_scr)
            g_scr[...] = jnp.zeros_like(g_scr)

        # ---- logits tile on the MXU: bf16 in, f32 accumulate ----
        logits = jnp.dot(x_ref[...], w_ref[...],
                         preferred_element_type=jnp.float32)        # [M, VT]
        mt, vt = logits.shape

        # single iota reused for label gather and (optional) pad masking
        col = jax.lax.broadcasted_iota(jnp.int32, (mt, vt), 1) + v * vt

        # gather the label logit from this tile (labels always < v_actual, so
        # this is safe before pad masking; no float one-hot multiply)
        labels = jnp.maximum(tok_ref[...][:, 0:1], 0.0).astype(jnp.int32)  # clamp(min=0)
        g_scr[...] += jnp.sum(jnp.where(col == labels, logits, 0.0),
                              axis=-1, keepdims=True)

        if vocab_is_padded:
            # padded columns only exist on the last vocab tile; fold the scalar
            # guard so earlier tiles keep every lane valid
            logits = jnp.where((v < last_v) | (col < v_actual), logits, NEG_INF)

        # ---- online log-sum-exp over the vocab ----
        m_prev = m_scr[...]
        m_new = jnp.maximum(m_prev, jnp.max(logits, axis=-1, keepdims=True))
        l_scr[...] = (l_scr[...] * jnp.exp(m_prev - m_new)
                      + jnp.sum(jnp.exp(logits - m_new), axis=-1, keepdims=True))
        m_scr[...] = m_new

        # ---- finalize: log-softmax gather + clipped-ratio loss + KL ----
        @pl.when(v == last_v)
        def _():
            log_cur = g_scr[...] - m_scr[...] - jnp.log(l_scr[...])   # [M, 1]
            tok = tok_ref[...]
            lg, lr, rw = tok[:, 1:2], tok[:, 2:3], tok[:, 3:4]
            ratio = jnp.exp(log_cur - lg)
            clipped = jnp.clip(ratio, 1.0 - clip, 1.0 + clip)
            ploss_ref[...] = jnp.minimum(ratio * rw, clipped * rw)
            kl_ref[...] = jnp.exp(lr - log_cur) - 1.0 - lr + log_cur

    return kernel


def grpo_forward(x, W, label_ids, log_gen, log_refp, rewards,
                 clip=CLIP, m_tile=512, v_tile=512):
    B, S, H = x.shape
    V = W.shape[1]
    N = B * S

    phys_vmem = _physical_vmem_bytes()
    vmem_limit = min(phys_vmem * 3 // 4, 112 * 1024 * 1024)   # 48 MiB on v7x
    budget = vmem_limit - 12 * 1024 * 1024

    m_tile, v_tile = _choose_tiles(N, H, V, m_tile, v_tile, budget)
    n_pad = _round_up(N, m_tile)
    # megacore: keep >= 2 row tiles so both v7x TensorCores get work
    if n_pad // m_tile < 2 and m_tile >= 32:
        m_tile = _round_up(m_tile // 2, 16)
        n_pad = _round_up(N, m_tile)
    v_pad = _round_up(V, v_tile)
    n_row_tiles = n_pad // m_tile
    n_v_tiles = v_pad // v_tile
    # padding never spans a whole vocab tile -> online-softmax max stays finite
    assert v_pad - V < v_tile

    # W consumed as stored: bf16, padded only when v_tile does not divide V
    w_b = W if W.dtype == jnp.bfloat16 else W.astype(jnp.bfloat16)
    if v_pad != V:
        w_b = jnp.pad(w_b, ((0, 0), (0, v_pad - V)))

    x_flat = jnp.pad(x.reshape(N, H).astype(jnp.bfloat16),
                     ((0, n_pad - N), (0, 0)))

    # pack the four per-token scalars into one (n_pad, 4) f32 array:
    # one DMA per row tile instead of four tiny strided ones
    tok = jnp.stack(
        [label_ids.reshape(N).astype(jnp.float32),
         log_gen.reshape(N).astype(jnp.float32),
         log_refp.reshape(N).astype(jnp.float32),
         jnp.broadcast_to(rewards[:, None], (B, S)).reshape(N).astype(jnp.float32)],
        axis=-1)
    tok = jnp.pad(tok, ((0, n_pad - N), (0, 0)))

    kernel = _make_grpo_kernel(V, v_pad, clip)

    cost = pl.CostEstimate(
        flops=2 * n_pad * H * v_pad,
        transcendentals=n_pad * v_pad,
        bytes_accessed=(x_flat.size * 2 + w_b.size * 2 * n_row_tiles
                        + tok.size * 4 + 2 * n_pad * 4))

    ploss_tok, kl_tok = pl.pallas_call(
        kernel,
        out_shape=(jax.ShapeDtypeStruct((n_pad, 1), jnp.float32),
                   jax.ShapeDtypeStruct((n_pad, 1), jnp.float32)),
        grid_spec=pltpu.PrefetchScalarGridSpec(
            num_scalar_prefetch=0,
            grid=(n_row_tiles, n_v_tiles),
            in_specs=[
                pl.BlockSpec((m_tile, H), lambda r, v: (r, 0)),    # x row tile
                pl.BlockSpec((H, v_tile), lambda r, v: (0, v)),    # W vocab tile
                pl.BlockSpec((m_tile, 4), lambda r, v: (r, 0)),    # packed scalars
            ],
            out_specs=[
                pl.BlockSpec((m_tile, 1), lambda r, v: (r, 0)),    # per-token ploss
                pl.BlockSpec((m_tile, 1), lambda r, v: (r, 0)),    # per-token KL
            ],
            scratch_shapes=[pltpu.VMEM((m_tile, 1), jnp.float32)] * 3,
        ),
        compiler_params=pltpu.CompilerParams(
            dimension_semantics=("parallel", "arbitrary"),
            vmem_limit_bytes=int(vmem_limit)),
        cost_estimate=cost,
    )(x_flat, w_b, tok)

    # ---- per-sequence normalization + batch mean (tiny [B,S] glue) ----
    ploss_tok = ploss_tok[:N, 0].reshape(B, S)
    kl_tok = kl_tok[:N, 0].reshape(B, S)
    mask = (label_ids != -100).astype(jnp.float32)
    msum = jnp.sum(mask, axis=-1)
    ploss = jnp.mean(jnp.sum(ploss_tok * mask, axis=-1) / msum)
    kl = jnp.mean(jnp.sum(kl_tok * mask, axis=-1) / msum)
    return ploss, kl


def grpo_reference(x, W, label_ids, log_gen, log_refp, rewards, clip=CLIP):
    """Pure-JAX mirror of the PyTorch GRPO.forward semantics (same bf16 matmul)."""
    logits = jnp.einsum('bsh,hv->bsv',
                        x.astype(jnp.bfloat16), W.astype(jnp.bfloat16),
                        preferred_element_type=jnp.float32)
    safe = jnp.maximum(label_ids, 0)
    mask = (label_ids != -100).astype(jnp.float32)
    probs = jax.nn.softmax(logits, axis=-1)
    tok_p = jnp.take_along_axis(probs, safe[..., None], axis=-1)[..., 0]
    log_cur = jnp.log(tok_p)
    ratio = jnp.exp(log_cur - log_gen)
    ploss = jnp.minimum(ratio * rewards[:, None],
                        jnp.clip(ratio, 1 - clip, 1 + clip) * rewards[:, None])
    ploss = jnp.mean(jnp.sum(ploss * mask, axis=-1) / jnp.sum(mask, axis=-1))
    kl = jnp.exp(log_refp - log_cur) - 1.0 - log_refp + log_cur
    kl = jnp.mean(jnp.sum(kl * mask, axis=-1) / jnp.sum(mask, axis=-1))
    return ploss, kl


if __name__ == "__main__":
    B, S, H = 2, 16, 32
    key = jax.random.PRNGKey(0)

    # Two configs: (V=384, v_tile=128) -> vocab divides the tile (3 tiles, no
    # pad mask, 2 row tiles); (V=320, v_tile=256) -> padded last vocab tile
    # exercising the streaming + masking path.
    for V, v_tile in ((384, 128), (320, 256)):
        keys = jax.random.split(jax.random.fold_in(key, V), 7)
        k_emb, k_w, k_tok, k_lab, k_gen, k_ref, k_rew = keys

        # deterministic synthetic policy-model parameters; W stored in bf16
        # once (no per-call cast/pad HBM pass inside the forward).
        embed_table = 0.02 * jax.random.normal(k_emb, (V, H), jnp.float32)
        W = (0.02 * jax.random.normal(k_w, (H, V), jnp.float32)).astype(jnp.bfloat16)

        # synthetic GRPO sample batch
        token_ids = jax.random.randint(k_tok, (B, S), 0, V, dtype=jnp.int32)
        label_ids = jax.random.randint(k_lab, (B, S), 0, V, dtype=jnp.int32)
        label_ids = label_ids.at[:, :2].set(-100)      # mask prompt positions
        log_gen_probs = -jax.random.uniform(k_gen, (B, S), jnp.float32, 1.0, 6.0)
        log_ref_probs = -jax.random.uniform(k_ref, (B, S), jnp.float32, 1.0, 6.0)
        rewards = jax.random.normal(k_rew, (B,), jnp.float32)
        # start_index is unused by GRPO.forward.

        # embedding lookup (plain-JAX glue for the synthetic policy model)
        x = embed_table[token_ids]                     # [B, S, H]

        ploss, kl = jax.block_until_ready(
            grpo_forward(x, W, label_ids, log_gen_probs, log_ref_probs, rewards,
                         v_tile=v_tile))

        ploss_ref, kl_ref = grpo_reference(
            x, W, label_ids, log_gen_probs, log_ref_probs, rewards)

        assert jnp.allclose(ploss, ploss_ref, atol=2e-3, rtol=2e-3), (V, ploss, ploss_ref)
        assert jnp.allclose(kl, kl_ref, atol=2e-3, rtol=2e-3), (V, kl, kl_ref)

    print("KERNEL_OK")
</pallas_src>

<mosaic_0001>
module attributes {stable_mosaic.version = 11 : i64} {
  func.func @kernel(%arg0: i32, %arg1: i32, %arg2: memref<16x32xbf16, #tpu.memory_space<vmem>>, %arg3: memref<32x128xbf16, #tpu.memory_space<vmem>>, %arg4: memref<16x4xf32, #tpu.memory_space<vmem>>, %arg5: memref<16x1xf32, #tpu.memory_space<vmem>>, %arg6: memref<16x1xf32, #tpu.memory_space<vmem>>, %arg7: memref<16x1xf32, #tpu.memory_space<vmem>>, %arg8: memref<16x1xf32, #tpu.memory_space<vmem>>, %arg9: memref<16x1xf32, #tpu.memory_space<vmem>>) attributes {dimension_semantics = [#tpu.dimension_semantics<parallel>, #tpu.dimension_semantics<arbitrary>], iteration_bounds = array<i64: 2, 3>, scalar_prefetch = 0 : i64, scratch_operands = 3 : i64, tpu.core_type = #tpu.core_type<tc>, window_params = [{transform_indices = @transform_0, window_bounds = array<i64: 16, 32>}, {transform_indices = @transform_1, window_bounds = array<i64: 32, 128>}, {transform_indices = @transform_2, window_bounds = array<i64: 16, 4>}, {transform_indices = @transform_3, window_bounds = array<i64: 16, 1>}, {transform_indices = @transform_4, window_bounds = array<i64: 16, 1>}]} {
    %c0_i32 = arith.constant 0 : i32
    %0 = arith.cmpi eq, %arg1, %c0_i32 : i32
    %1 = arith.extui %0 : i1 to i32
    %c0_i32_0 = arith.constant 0 : i32
    %2 = arith.cmpi ne, %1, %c0_i32_0 : i32
    scf.if %2 {
      %cst_24 = arith.constant -1.000000e+30 : f32
      %43 = vector.broadcast %cst_24 : f32 to vector<16x1xf32>
      %c0_25 = arith.constant 0 : index
      %c0_26 = arith.constant 0 : index
      %44 = vector.load %arg7[%c0_25, %c0_26] : memref<16x1xf32, #tpu.memory_space<vmem>>, vector<16x1xf32>
      tpu.vector_store %arg7[%c0_25, %c0_26], %43 {strides = array<i32>} : memref<16x1xf32, #tpu.memory_space<vmem>>, vector<16x1xf32>,
      %cst_27 = arith.constant 0.000000e+00 : f32
      %45 = vector.broadcast %cst_27 : f32 to vector<16x1xf32>
      %c0_28 = arith.constant 0 : index
      %c0_29 = arith.constant 0 : index
      %46 = vector.load %arg8[%c0_28, %c0_29] : memref<16x1xf32, #tpu.memory_space<vmem>>, vector<16x1xf32>
      tpu.vector_store %arg8[%c0_28, %c0_29], %45 {strides = array<i32>} : memref<16x1xf32, #tpu.memory_space<vmem>>, vector<16x1xf32>,
      %cst_30 = arith.constant 0.000000e+00 : f32
      %47 = vector.broadcast %cst_30 : f32 to vector<16x1xf32>
      %c0_31 = arith.constant 0 : index
      %c0_32 = arith.constant 0 : index
      %48 = vector.load %arg9[%c0_31, %c0_32] : memref<16x1xf32, #tpu.memory_space<vmem>>, vector<16x1xf32>
      tpu.vector_store %arg9[%c0_31, %c0_32], %47 {strides = array<i32>} : memref<16x1xf32, #tpu.memory_space<vmem>>, vector<16x1xf32>,
    } else {
    }
    %c0 = arith.constant 0 : index
    %c0_1 = arith.constant 0 : index
    %3 = vector.load %arg2[%c0, %c0_1] : memref<16x32xbf16, #tpu.memory_space<vmem>>, vector<16x32xbf16>
    %c0_2 = arith.constant 0 : index
    %c0_3 = arith.constant 0 : index
    %4 = vector.load %arg3[%c0_2, %c0_3] : memref<32x128xbf16, #tpu.memory_space<vmem>>, vector<32x128xbf16>
    %cst = arith.constant dense<0.000000e+00> : vector<16x128xf32>
    %5 = tpu.matmul %3, %4, %cst {dimension_numbers = #tpu.dot_dimension_numbers<[1], [0], [0], [1], [0, 0, 1, 1], [], []>} : vector<16x32xbf16>, vector<32x128xbf16>, vector<16x128xf32> -> vector<16x128xf32>
    %6 = tpu.iota {dimensions = array<i32: 1>} : vector<16x128xi32>
    %c128_i32 = arith.constant 128 : i32
    %7 = arith.muli %arg1, %c128_i32 : i32
    %8 = vector.broadcast %7 : i32 to vector<16x128xi32>
    %9 = arith.addi %6, %8 : vector<16x128xi32>
    %c0_4 = arith.constant 0 : index
    %c0_5 = arith.constant 0 : index
    %10 = vector.load %arg4[%c0_4, %c0_5] : memref<16x4xf32, #tpu.memory_space<vmem>>, vector<16x4xf32>
    %11 = vector.extract_strided_slice %10 {offsets = [0, 0], sizes = [16, 1], strides = [1, 1]} : vector<16x4xf32> to vector<16x1xf32>
    %cst_6 = arith.constant 0.000000e+00 : f32
    %12 = vector.broadcast %cst_6 : f32 to vector<16x1xf32>
    %13 = arith.maximumf %11, %12 : vector<16x1xf32>
    %14 = arith.fptosi %13 : vector<16x1xf32> to vector<16x1xi32>
    %c0_7 = arith.constant 0 : index
    %c0_8 = arith.constant 0 : index
    %15 = vector.load %arg9[%c0_7, %c0_8] : memref<16x1xf32, #tpu.memory_space<vmem>>, vector<16x1xf32>
    %16 = vector.broadcast %14 : vector<16x1xi32> to vector<16x128xi32>
    %17 = arith.cmpi eq, %9, %16 : vector<16x128xi32>
    %cst_9 = arith.constant 0.000000e+00 : f32
    %18 = vector.broadcast %cst_9 : f32 to vector<16x128xf32>
    %19 = arith.select %17, %5, %18 : vector<16x128xi1>, vector<16x128xf32>
    %cst_10 = arith.constant dense<0.000000e+00> : vector<16xf32>
    %20 = vector.multi_reduction <add>, %19, %cst_10 [1] : vector<16x128xf32> to vector<16xf32>
    %21 = vector.shape_cast %20 : vector<16xf32> to vector<16x1xf32>
    %22 = arith.addf %15, %21 : vector<16x1xf32>
    %c0_11 = arith.constant 0 : index
    %c0_12 = arith.constant 0 : index
    %23 = vector.load %arg9[%c0_11, %c0_12] : memref<16x1xf32, #tpu.memory_space<vmem>>, vector<16x1xf32>
    tpu.vector_store %arg9[%c0_11, %c0_12], %22 {strides = array<i32>} : memref<16x1xf32, #tpu.memory_space<vmem>>, vector<16x1xf32>,
    %c0_13 = arith.constant 0 : index
    %c0_14 = arith.constant 0 : index
    %24 = vector.load %arg7[%c0_13, %c0_14] : memref<16x1xf32, #tpu.memory_space<vmem>>, vector<16x1xf32>
    %cst_15 = arith.constant dense<0xFF800000> : vector<16xf32>
    %25 = vector.multi_reduction <maximumf>, %5, %cst_15 [1] : vector<16x128xf32> to vector<16xf32>
    %26 = vector.shape_cast %25 : vector<16xf32> to vector<16x1xf32>
    %27 = arith.maximumf %24, %26 : vector<16x1xf32>
    %c0_16 = arith.constant 0 : index
    %c0_17 = arith.constant 0 : index
    %28 = vector.load %arg8[%c0_16, %c0_17] : memref<16x1xf32, #tpu.memory_space<vmem>>, vector<16x1xf32>
    %29 = arith.subf %24, %27 : vector<16x1xf32>
    %30 = math.exp %29 : vector<16x1xf32>
    %31 = arith.mulf %28, %30 : vector<16x1xf32>
    %32 = vector.broadcast %27 : vector<16x1xf32> to vector<16x128xf32>
    %33 = arith.subf %5, %32 : vector<16x128xf32>
    %34 = math.exp %33 : vector<16x128xf32>
    %cst_18 = arith.constant dense<0.000000e+00> : vector<16xf32>
    %35 = vector.multi_reduction <add>, %34, %cst_18 [1] : vector<16x128xf32> to vector<16xf32>
    %36 = vector.shape_cast %35 : vector<16xf32> to vector<16x1xf32>
    %37 = arith.addf %31, %36 : vector<16x1xf32>
    %c0_19 = arith.constant 0 : index
    %c0_20 = arith.constant 0 : index
    %38 = vector.load %arg8[%c0_19, %c0_20] : memref<16x1xf32, #tpu.memory_space<vmem>>, vector<16x1xf32>
    tpu.vector_store %arg8[%c0_19, %c0_20], %37 {strides = array<i32>} : memref<16x1xf32, #tpu.memory_space<vmem>>, vector<16x1xf32>,
    %c0_21 = arith.constant 0 : index
    %c0_22 = arith.constant 0 : index
    %39 = vector.load %arg7[%c0_21, %c0_22] : memref<16x1xf32, #tpu.memory_space<vmem>>, vector<16x1xf32>
    tpu.vector_store %arg7[%c0_21, %c0_22], %27 {strides = array<i32>} : memref<16x1xf32, #tpu.memory_space<vmem>>, vector<16x1xf32>,
    %c2_i32 = arith.constant 2 : i32
    %40 = arith.cmpi eq, %arg1, %c2_i32 : i32
    %41 = arith.extui %40 : i1 to i32
    %c0_i32_23 = arith.constant 0 : i32
    %42 = arith.cmpi ne, %41, %c0_i32_23 : i32
    scf.if %42 {
      %c0_24 = arith.constant 0 : index
      %c0_25 = arith.constant 0 : index
      %43 = vector.load %arg9[%c0_24, %c0_25] : memref<16x1xf32, #tpu.memory_space<vmem>>, vector<16x1xf32>
      %c0_26 = arith.constant 0 : index
      %c0_27 = arith.constant 0 : index
      %44 = vector.load %arg7[%c0_26, %c0_27] : memref<16x1xf32, #tpu.memory_space<vmem>>, vector<16x1xf32>
      %45 = arith.subf %43, %44 : vector<16x1xf32>
      %c0_28 = arith.constant 0 : index
      %c0_29 = arith.constant 0 : index
      %46 = vector.load %arg8[%c0_28, %c0_29] : memref<16x1xf32, #tpu.memory_space<vmem>>, vector<16x1xf32>
      %47 = math.log %46 : vector<16x1xf32>
      %48 = arith.subf %45, %47 : vector<16x1xf32>
      %c0_30 = arith.constant 0 : index
      %c0_31 = arith.constant 0 : index
      %49 = vector.load %arg4[%c0_30, %c0_31] : memref<16x4xf32, #tpu.memory_space<vmem>>, vector<16x4xf32>
      %50 = vector.extract_strided_slice %49 {offsets = [0, 1], sizes = [16, 1], strides = [1, 1]} : vector<16x4xf32> to vector<16x1xf32>
      %51 = vector.extract_strided_slice %49 {offsets = [0, 2], sizes = [16, 1], strides = [1, 1]} : vector<16x4xf32> to vector<16x1xf32>
      %52 = vector.extract_strided_slice %49 {offsets = [0, 3], sizes = [16, 1], strides = [1, 1]} : vector<16x4xf32> to vector<16x1xf32>
      %53 = arith.subf %48, %50 : vector<16x1xf32>
      %54 = math.exp %53 : vector<16x1xf32>
      %cst_32 = arith.constant 0.899999976 : f32
      %cst_33 = arith.constant 1.100000e+00 : f32
      %55 = vector.broadcast %cst_32 : f32 to vector<16x1xf32>
      %56 = arith.maximumf %55, %54 : vector<16x1xf32>
      %57 = vector.broadcast %cst_33 : f32 to vector<16x1xf32>
      %58 = arith.minimumf %57, %56 : vector<16x1xf32>
      %59 = arith.mulf %54, %52 : vector<16x1xf32>
      %60 = arith.mulf %58, %52 : vector<16x1xf32>
      %61 = arith.minimumf %59, %60 : vector<16x1xf32>
      %c0_34 = arith.constant 0 : index
      %c0_35 = arith.constant 0 : index
      %62 = vector.load %arg5[%c0_34, %c0_35] : memref<16x1xf32, #tpu.memory_space<vmem>>, vector<16x1xf32>
      tpu.vector_store %arg5[%c0_34, %c0_35], %61 {strides = array<i32>} : memref<16x1xf32, #tpu.memory_space<vmem>>, vector<16x1xf32>,
      %63 = arith.subf %51, %48 : vector<16x1xf32>
      %64 = math.exp %63 : vector<16x1xf32>
      %cst_36 = arith.constant 1.000000e+00 : f32
      %65 = vector.broadcast %cst_36 : f32 to vector<16x1xf32>
      %66 = arith.subf %64, %65 : vector<16x1xf32>
      %67 = arith.subf %66, %51 : vector<16x1xf32>
      %68 = arith.addf %67, %48 : vector<16x1xf32>
      %c0_37 = arith.constant 0 : index
      %c0_38 = arith.constant 0 : index
      %69 = vector.load %arg6[%c0_37, %c0_38] : memref<16x1xf32, #tpu.memory_space<vmem>>, vector<16x1xf32>
      tpu.vector_store %arg6[%c0_37, %c0_38], %68 {strides = array<i32>} : memref<16x1xf32, #tpu.memory_space<vmem>>, vector<16x1xf32>,
    } else {
    }
    return
  }
  func.func @transform_0(%arg0: i32, %arg1: i32) -> (i32, i32) {
    %c0_i32 = arith.constant 0 : i32
    %c0_i32_0 = arith.constant 0 : i32
    return %arg0, %c0_i32 : i32, i32
  }
  func.func @transform_1(%arg0: i32, %arg1: i32) -> (i32, i32) {
    %c0_i32 = arith.constant 0 : i32
    %c0_i32_0 = arith.constant 0 : i32
    return %c0_i32, %arg1 : i32, i32
  }
  func.func @transform_2(%arg0: i32, %arg1: i32) -> (i32, i32) {
    %c0_i32 = arith.constant 0 : i32
    %c0_i32_0 = arith.constant 0 : i32
    return %arg0, %c0_i32 : i32, i32
  }
  func.func @transform_3(%arg0: i32, %arg1: i32) -> (i32, i32) {
    %c0_i32 = arith.constant 0 : i32
    %c0_i32_0 = arith.constant 0 : i32
    return %arg0, %c0_i32 : i32, i32
  }
  func.func @transform_4(%arg0: i32, %arg1: i32) -> (i32, i32) {
    %c0_i32 = arith.constant 0 : i32
    %c0_i32_0 = arith.constant 0 : i32
    return %arg0, %c0_i32 : i32, i32
  }
}

</mosaic_0001>

<llo_original>
// kernel: tpu_custom_call.1
$region0: #{tpu_custom_call.1}
  #allocation0 [shape = 'u32[]', space=smem, size = 0x4, offset = 0x4, fixed_abs, tag = 'smem constant byte address 0x4 - core index']
  #allocation1 [shape = 'u32[72,128]{1,0:T(1,128)}', space=vmem, size = 0x9000, scoped, tag = 'internal scratch']
  #allocation2 [shape = 'f32[16,1]{1,0:T(8,128)}', space=vmem, size = 0x2000, scoped, tag = 'scratch operand']
  #allocation3 [shape = 'f32[16,1]{1,0:T(8,128)}', space=vmem, size = 0x2000, scoped, tag = 'scratch operand']
  #allocation4 [shape = 'f32[16,1]{1,0:T(8,128)}', space=vmem, size = 0x2000, scoped, tag = 'scratch operand']
  %s0 = inlined_call_operand.vmem [shape: bf16[32,32], index: 0, kind: input, shape index: {}]
  %s1 = inlined_call_operand.hbm [shape: bf16[32,384], index: 1, kind: input, shape index: {}]
  %s2 = inlined_call_operand.vmem [shape: f32[32,4], index: 2, kind: input, shape index: {}]
  %s3 = inlined_call_operand.vmem [shape: f32[32,1], index: 3, kind: output, shape index: {0}]
  %s4 = inlined_call_operand.vmem [shape: f32[32,1], index: 4, kind: output, shape index: {1}]
  %5 = xla_tuple %s3, %s4
  %s6 = sld [smem:[#allocation0]]
  $region65: #{tpu_custom_call.1} parent=0
    _
  %s8 = ssub.s32 1, %s6
  %s9 = scalar_select 0, %s8, %s6
  $region1: #{tpu_custom_call.1} parent=0
    #allocation5 [shape = 'u8[16384]{0}', space=vmem, size = 0x4000, scoped, tag = 'input window, operand 1']
    #allocation6 [shape = 's32[2]{0}', space=sflag, size = 0x8, scoped, tag = 'scoped memory for tpu_custom_call.1']
    %10 = vsyncpa [#allocation6], 0
    %s11 = scalar_lea.sflag [#allocation6], 1
    %12 = vsyncpa %s11, 0
    loop: start=0, step=1, limit=8
    $region2: #{tpu_custom_call.1} parent=1 // loop_pre_header
      _
    $region3: #{tpu_custom_call.1} parent=1 // loop_header
      %s14 = sphi 0, %s18
      %p15 = scmp.ge.s32.totalorder %s14, 8
      %s21 = sphi 0, %s33
      %s22 = sphi 0, %s29
      %s23 = sphi 0, %s21
      %s24 = sphi 0, %s22
      %s25 = sphi 0, %s23
      %s26 = sphi 0, %s24
      %s36 = sphi 0, %s38
      %s39 = sphi 0, %s36
      %s40 = sphi 0, %s39
      %s56 = sphi 0, %s40
      %s62 = sphi 0, %s64
      %s65 = sphi 0, %s62
      %s66 = sphi 0, %s65
      %s82 = sphi 0, %s66
      %s88 = sphi 0, %s90
      %s91 = sphi 0, %s88
      %s92 = sphi 0, %s91
      %s108 = sphi 0, %s92
      %s114 = sphi 0, %s116
      %s117 = sphi 0, %s114
      %s118 = sphi 0, %s117
      %s134 = sphi 0, %s118
      %s140 = sphi 0, %s142
      %s143 = sphi 0, %s140
      %s144 = sphi 0, %s143
      %s160 = sphi 0, %s144
    $region4: #{tpu_custom_call.1} parent=1 // loop_header_branch
      %17 = sbr.rel (%p15) target = $region8
    $region5: #{tpu_custom_call.1} parent=1 // loop_body
      %s19 = ssub.s32 %s14, 1
      %s20 = ssub.s32 %s14, 2
      %s27 = sadd.s32 1, %s22
      %p28 = scmp.ge.s32.totalorder %s27, 3
      %s29 = scalar_select %p28, 0, %s27
      %s30 = sadd.s32 1, %s21
      %s31 = scalar_select %p28, %s30, %s21
      %p32 = scmp.ge.s32.totalorder %s31, 2
      %s33 = scalar_select %p32, 0, %s31
      %s34 = ssub.s32 %s21, %s33
      %p35 = scmp.eq.s32.totalorder %s34, 0
      %s37 = sadd.s32 %s36, 1
      %s38 = scalar_select %p35, %s36, %s37
      %p41 = pneg %p35
      %p42 = scmp.eq.s32.totalorder %s14, 5
      %p43 = por %p41, %p42
      %p44 = scmp.ne.s32.totalorder %s36, %s39
      %p45 = scmp.eq.s32.totalorder %s14, 0
      %p46 = por %p44, %p45
      %p47 = scmp.ne.s32.totalorder %s36, %s39
      %p48 = scmp.eq.s32.totalorder %s19, 5
      %p49 = por %p47, %p48
      %p50 = scmp.ne.s32.totalorder %s39, %s40
      %p51 = scmp.eq.s32.totalorder %s19, 0
      %p52 = por %p50, %p51
      %p53 = scmp.ne.s32.totalorder %s39, %s40
      %p54 = scmp.eq.s32.totalorder %s20, 5
      %p55 = por %p53, %p54
      %p57 = scmp.ne.s32.totalorder %s40, %s56
      %p58 = scmp.eq.s32.totalorder %s20, 0
      %p59 = por %p57, %p58
      %s60 = ssub.s32 %s22, %s29
      %p61 = scmp.eq.s32.totalorder %s60, 0
      %s63 = sadd.s32 %s62, 1
      %s64 = scalar_select %p61, %s62, %s63
      %p67 = pneg %p61
      %p68 = scmp.eq.s32.totalorder %s14, 5
      %p69 = por %p67, %p68
      %p70 = scmp.ne.s32.totalorder %s62, %s65
      %p71 = scmp.eq.s32.totalorder %s14, 0
      %p72 = por %p70, %p71
      %p73 = scmp.ne.s32.totalorder %s62, %s65
      %p74 = scmp.eq.s32.totalorder %s19, 5
      %p75 = por %p73, %p74
      %p76 = scmp.ne.s32.totalorder %s65, %s66
      %p77 = scmp.eq.s32.totalorder %s19, 0
      %p78 = por %p76, %p77
      %p79 = scmp.ne.s32.totalorder %s65, %s66
      %p80 = scmp.eq.s32.totalorder %s20, 5
      %p81 = por %p79, %p80
      %p83 = scmp.ne.s32.totalorder %s66, %s82
      %p84 = scmp.eq.s32.totalorder %s20, 0
      %p85 = por %p83, %p84
      %s86 = ssub.s32 %s21, %s33
      %p87 = scmp.eq.s32.totalorder %s86, 0
      %s89 = sadd.s32 %s88, 1
      %s90 = scalar_select %p87, %s88, %s89
      %p93 = pneg %p87
      %p94 = scmp.eq.s32.totalorder %s14, 5
      %p95 = por %p93, %p94
      %p96 = scmp.ne.s32.totalorder %s88, %s91
      %p97 = scmp.eq.s32.totalorder %s14, 0
      %p98 = por %p96, %p97
      %p99 = scmp.ne.s32.totalorder %s88, %s91
      %p100 = scmp.eq.s32.totalorder %s19, 5
      %p101 = por %p99, %p100
      %p102 = scmp.ne.s32.totalorder %s91, %s92
      %p103 = scmp.eq.s32.totalorder %s19, 0
      %p104 = por %p102, %p103
      %p105 = scmp.ne.s32.totalorder %s91, %s92
      %p106 = scmp.eq.s32.totalorder %s20, 5
      %p107 = por %p105, %p106
      %p109 = scmp.ne.s32.totalorder %s92, %s108
      %p110 = scmp.eq.s32.totalorder %s20, 0
      %p111 = por %p109, %p110
      %s112 = ssub.s32 %s21, %s33
      %p113 = scmp.eq.s32.totalorder %s112, 0
      %s115 = sadd.s32 %s114, 1
      %s116 = scalar_select %p113, %s114, %s115
      %p119 = pneg %p113
      %p120 = scmp.eq.s32.totalorder %s14, 5
      %p121 = por %p119, %p120
      %p122 = scmp.ne.s32.totalorder %s114, %s117
      %p123 = scmp.eq.s32.totalorder %s14, 0
      %p124 = por %p122, %p123
      %p125 = scmp.ne.s32.totalorder %s114, %s117
      %p126 = scmp.eq.s32.totalorder %s19, 5
      %p127 = por %p125, %p126
      %p128 = scmp.ne.s32.totalorder %s117, %s118
      %p129 = scmp.eq.s32.totalorder %s19, 0
      %p130 = por %p128, %p129
      %p131 = scmp.ne.s32.totalorder %s117, %s118
      %p132 = scmp.eq.s32.totalorder %s20, 5
      %p133 = por %p131, %p132
      %p135 = scmp.ne.s32.totalorder %s118, %s134
      %p136 = scmp.eq.s32.totalorder %s20, 0
      %p137 = por %p135, %p136
      %s138 = ssub.s32 %s21, %s33
      %p139 = scmp.eq.s32.totalorder %s138, 0
      %s141 = sadd.s32 %s140, 1
      %s142 = scalar_select %p139, %s140, %s141
      %p145 = pneg %p139
      %p146 = scmp.eq.s32.totalorder %s14, 5
      %p147 = por %p145, %p146
      %p148 = scmp.ne.s32.totalorder %s140, %s143
      %p149 = scmp.eq.s32.totalorder %s14, 0
      %p150 = por %p148, %p149
      %p151 = scmp.ne.s32.totalorder %s140, %s143
      %p152 = scmp.eq.s32.totalorder %s19, 5
      %p153 = por %p151, %p152
      %p154 = scmp.ne.s32.totalorder %s143, %s144
      %p155 = scmp.eq.s32.totalorder %s19, 0
      %p156 = por %p154, %p155
      %p157 = scmp.ne.s32.totalorder %s143, %s144
      %p158 = scmp.eq.s32.totalorder %s20, 5
      %p159 = por %p157, %p158
      %p161 = scmp.ne.s32.totalorder %s144, %s160
      %p162 = scmp.eq.s32.totalorder %s20, 0
      %p163 = por %p161, %p162
      %p164 = scmp.le.s32.totalorder 1, %s14
      %p165 = scmp.lt.s32.totalorder %s14, 7
      %p166 = pnand %p164, %p165
      %p167 = pneg %p166
      // Predicated region
      $region9: #{tpu_custom_call.1} parent=5 // pred_check
        _
      $region10: #{tpu_custom_call.1} parent=5 // pred_check_branch
        %169 = sbr.rel (%p166) target = $region12
      $region11: #{tpu_custom_call.1} parent=5 // pred_region
        %s170 = ssub.s32 %s14, 1
      $region12: #{tpu_custom_call.1} parent=5 // pred_fallthru
        _
      %p171 = scmp.lt.s32.totalorder %s14, 6
      // Predicated region
      $region13: #{tpu_custom_call.1} parent=5 // pred_check
        %p172 = pneg %p171
      $region14: #{tpu_custom_call.1} parent=5 // pred_check_branch
        %174 = sbr.rel (%p172) target = $region16
      $region15: #{tpu_custom_call.1} parent=5 // pred_region
        // Predicated region
        $region17: #{tpu_custom_call.1} parent=15 // pred_check
          %p175 = pneg %p46
        $region18: #{tpu_custom_call.1} parent=15 // pred_check_branch
          %177 = sbr.rel (%p175) target = $region20
        $region19: #{tpu_custom_call.1} parent=15 // pred_region
          %s178 = smul.u32 2, %s21
          %p179 = scmp.lt.s32.totalorder %s178, 3
          %s180 = scalar_select %p179, %s178, 3
          %s181 = smul.addr %s180, 4
          %s182 = scalar_lea.vmem %s0, %s181
          %s183 = smul.u32 2, %s21
        $region20: #{tpu_custom_call.1} parent=15 // pred_fallthru
          _
        // Predicated region
        $region21: #{tpu_custom_call.1} parent=15 // pred_check
          %p184 = pneg %p72
        $region22: #{tpu_custom_call.1} parent=15 // pred_check_branch
          %186 = sbr.rel (%p184) target = $region24
        $region23: #{tpu_custom_call.1} parent=15 // pred_region
          %s187 = sand.u32 %s62, 1
          %s188 = scalar_lea.sflag [#allocation6], %s187
          %s189 = sand.u32 %s62, 1
          %s190 = smul.addr %s189, 16
          %s191 = scalar_lea.vmem [#allocation5], %s190
          %193 = vsyncadd %s188, 0
          %s194 = smul.addr %s22, 4
          %s195 = scalar_lea.hbm %s1, %s194
          %s196 = sshll.u32 %s195, 4
          %s197 = int_to_ptr.hbm [resolvable:$true] %s196
          %s198 = sshll.u32 %s191, 4
          %s199 = int_to_ptr.vmem [resolvable:$true] %s198
          %204 = dma.hbm_to_vmem [thread:$0]  %s197, 256, %s199, %s188, 192, 64, 4
        $region24: #{tpu_custom_call.1} parent=15 // pred_fallthru
          _
        // Predicated region
        $region25: #{tpu_custom_call.1} parent=15 // pred_check
          %p205 = pneg %p98
        $region26: #{tpu_custom_call.1} parent=15 // pred_check_branch
          %207 = sbr.rel (%p205) target = $region28
        $region27: #{tpu_custom_call.1} parent=15 // pred_region
          %s208 = smul.u32 2, %s21
          %p209 = scmp.lt.s32.totalorder %s208, 3
          %s210 = scalar_select %p209, %s208, 3
          %s211 = smul.addr %s210, 8
          %s212 = scalar_lea.vmem %s2, %s211
          %s213 = smul.u32 2, %s21
        $region28: #{tpu_custom_call.1} parent=15 // pred_fallthru
          _
      $region16: #{tpu_custom_call.1} parent=5 // pred_fallthru
        _
      %p214 = scmp.le.s32.totalorder 1, %s14
      %p215 = scmp.lt.s32.totalorder %s14, 7
      %p216 = pnand %p214, %p215
      %p217 = pneg %p216
      // Predicated region
      $region29: #{tpu_custom_call.1} parent=5 // pred_check
        _
      $region30: #{tpu_custom_call.1} parent=5 // pred_check_branch
        %219 = sbr.rel (%p216) target = $region32
      $region31: #{tpu_custom_call.1} parent=5 // pred_region
        %s220 = ssub.s32 %s14, 1
        %s221 = sand.u32 %s65, 1
        %s222 = scalar_lea.sflag [#allocation6], %s221
        %s223 = sand.u32 %s65, 1
        %s224 = smul.addr %s223, 16
        %s225 = scalar_lea.vmem [#allocation5], %s224
        // Predicated region
        $region33: #{tpu_custom_call.1} parent=31 // pred_check
          %p226 = pneg %p78
        $region34: #{tpu_custom_call.1} parent=31 // pred_check_branch
          %228 = sbr.rel (%p226) target = $region36
        $region35: #{tpu_custom_call.1} parent=31 // pred_region
          %230 = dma.done %s222, 256
        $region36: #{tpu_custom_call.1} parent=31 // pred_fallthru
          _
        %s231 = smul.u32 2, %s23
        %p232 = scmp.lt.s32.totalorder %s231, 3
        %s233 = scalar_select %p232, %s231, 3
        %s234 = smul.addr %s233, 4
        %s235 = scalar_lea.vmem %s0, %s234
        %p236 = pneg %p52
        %p237 = pneg %p49
        %s238 = sand.u32 %s65, 1
        %s239 = scalar_lea.sflag [#allocation6], %s238
        %s240 = sand.u32 %s65, 1
        %s241 = smul.addr %s240, 16
        %s242 = scalar_lea.vmem [#allocation5], %s241
        %p243 = pneg %p78
        %p244 = pneg %p75
        %s245 = smul.u32 2, %s23
        %p246 = scmp.lt.s32.totalorder %s245, 3
        %s247 = scalar_select %p246, %s245, 3
        %s248 = smul.addr %s247, 8
        %s249 = scalar_lea.vmem %s2, %s248
        %p250 = pneg %p104
        %p251 = pneg %p101
        %p252 = pneg %p130
        %p253 = pneg %p127
        %s254 = smul.u32 2, %s23
        %p255 = scmp.lt.s32.totalorder %s254, 3
        %s256 = scalar_select %p255, %s254, 3
        %s257 = smul.addr %s256, 8
        %s258 = scalar_lea.vmem %s3, %s257
        %p259 = pneg %p156
        %p260 = pneg %p153
        %s261 = smul.u32 2, %s23
        %p262 = scmp.lt.s32.totalorder %s261, 3
        %s263 = scalar_select %p262, %s261, 3
        %s264 = smul.addr %s263, 8
        %s265 = scalar_lea.vmem %s4, %s264
        %s266 = smul.u32 2, %s23
        %p267 = scmp.lt.s32.totalorder %s266, 3
        %s268 = scalar_select %p267, %s266, 3
        %s269 = smul.addr %s268, 4
        %s270 = scalar_lea.vmem %s0, %s269
        %s271 = smul.u32 2, %s23
        %s272 = smul.u32 2, %s23
        %p273 = scmp.lt.s32.totalorder %s272, 3
        %s274 = scalar_select %p273, %s272, 3
        %s275 = smul.addr %s274, 8
        %s276 = scalar_lea.vmem %s2, %s275
        %s277 = smul.u32 2, %s23
        %s278 = smul.u32 2, %s23
        %p279 = scmp.lt.s32.totalorder %s278, 3
        %s280 = scalar_select %p279, %s278, 3
        %s281 = smul.addr %s280, 8
        %s282 = scalar_lea.vmem %s3, %s281
        %s283 = smul.u32 2, %s23
        %s284 = smul.u32 2, %s23
        %p285 = scmp.lt.s32.totalorder %s284, 3
        %s286 = scalar_select %p285, %s284, 3
        %s287 = smul.addr %s286, 8
        %s288 = scalar_lea.vmem %s4, %s287
        %s289 = smul.u32 2, %s23
        %p291 = scmp.eq.s32.totalorder %s24, 0
        // Predicated region
        $region37: #{tpu_custom_call.1} parent=31 // pred_check
          %p292 = pneg %p291
        $region38: #{tpu_custom_call.1} parent=31 // pred_check_branch
          %294 = sbr.rel (%p292) target = $region40
        $region39: #{tpu_custom_call.1} parent=31 // pred_region
          %vm295 = vcmask 7168
          %296 = vst.msk [vmem:[#allocation2] sm:$0xff] %vm295, -1e+30
          %297 = vst.msk [vmem:[#allocation2 + $0x8] sm:$0xff] %vm295, -1e+30
          %298 = vst.msk [vmem:[#allocation3] sm:$0xff] %vm295, 0.0
          %299 = vst.msk [vmem:[#allocation3 + $0x8] sm:$0xff] %vm295, 0.0
          %300 = vst.msk [vmem:[#allocation4] sm:$0xff] %vm295, 0.0
          %301 = vst.msk [vmem:[#allocation4 + $0x8] sm:$0xff] %vm295, 0.0
        $region40: #{tpu_custom_call.1} parent=31 // pred_fallthru
          _
        %v302 = vld [vmem:[%s270] sm:$0xf]
        %v303 = vld [vmem:[%s270 + $0x4] sm:$0xf]
        %v304 = vld [vmem:[%s225] sm:$0xf]
        %v305 = vld [vmem:[%s225 + $0x4] sm:$0xf]
        %v306 = vld [vmem:[%s225 + $0x8] sm:$0xf]
        %v307 = vld [vmem:[%s225 + $0xc] sm:$0xf]
        %v310 = vunpack.c.l.b16 %v302
        %v311 = vunpack.c.l.b16 %v303
        %v312 = vpack.c.b16 %v311, %v310
        %v317 = vunpack.c.l.b16 %v304
        %v318 = vunpack.c.l.b16 %v305
        %v319 = vunpack.c.l.b16 %v306
        %v320 = vunpack.c.l.b16 %v307
        %v321 = vpack.c.b16 %v318, %v317
        %v322 = vpack.c.b16 %v320, %v319
        %vm325 = vcmask 261120
        %v327 = vsel %vm325, %v312, 0
        %329 = vmatpush.bf16.msra.mxu0 0
        %330 = vmatpush.bf16.msra.mxu0 0
        %331 = vmatpush.bf16.msra.mxu0 0
        %332 = vmatpush.bf16.msra.mxu0 0
        %333 = vmatpush.bf16.msra.mxu0 0
        %334 = vmatpush.bf16.msra.mxu0 0
        %335 = vmatpush.bf16.msra.mxu0 %v322
        %336 = vmatpush.bf16.msra.mxu0 %v321
        %337 = vmatmul.bf16.gmra.mxu0 %v327
        %v338 = vpop.f32.mrf.mxu0
        %v339 = vadd.f32 0.0, %v338
        %v340 = vpop.f32.mrf.mxu0
        %v341 = vadd.f32 0.0, %v340
        %342 = vdwg.mxu0
        %v343 = vlaneseq
        %v344 = vand.u32 %v343, 127
        %s345 = smul.u32 %s24, 128
        %v346 = vstv %s345
        %v347 = vadd.s32 %v344, %v346
        %v348 = vld [vmem:[%s276] sm:$0xff]
        %v349 = vld [vmem:[%s276 + $0x8] sm:$0xff]
        %v350 = vmax.f32 %v348, 0.0
        %v351 = vmax.f32 %v349, 0.0
        %v352 = vcvt.f32.s32.to.zero.pseudo %v350
        %v353 = vcvt.f32.s32.to.zero.pseudo %v351
        %v354 = vld [vmem:[#allocation4] sm:$0xff]
        %v355 = vld [vmem:[#allocation4 + $0x8] sm:$0xff]
        %356 = vset.pattern.permute.xlu0 0
        %357 = vperm.xlu0 %356, %v352
        %v358 = vpop.permute.xlu0 %357
        %359 = vset.pattern.permute.xlu0 0
        %360 = vperm.xlu0 %359, %v353
        %v361 = vpop.permute.xlu0 %360
        %vm362 = vcmp.eq.s32.totalorder %v347, %v358
        %vm363 = vcmp.eq.s32.totalorder %v347, %v361
        %v364 = vsel %vm362, %v339, 0.0
        %v365 = vsel %vm363, %v341, 0.0
        %366 = vadd.xlane.f32.xlu0 %v364
        %v367 = vpop.xlane.xlu0 %366
        %368 = vadd.xlane.f32.xlu0 %v365
        %v369 = vpop.xlane.xlu0 %368
        %v370 = vadd.f32 %v354, %v367
        %v371 = vadd.f32 %v355, %v369
        %vm372 = vcmask 7168
        %373 = vst.msk [vmem:[#allocation4] sm:$0xff] %vm372, %v370
        %374 = vst.msk [vmem:[#allocation4 + $0x8] sm:$0xff] %vm372, %v371
        %v375 = vld [vmem:[#allocation2] sm:$0xff]
        %v376 = vld [vmem:[#allocation2 + $0x8] sm:$0xff]
        %377 = vmax.xlane.f32.xlu0 %v339
        %v378 = vpop.xlane.xlu0 %377
        %379 = vmax.xlane.f32.xlu0 %v341
        %v380 = vpop.xlane.xlu0 %379
        %v381 = vmax.f32 %v375, %v378
        %v382 = vmax.f32 %v376, %v380
        %v383 = vld [vmem:[#allocation3] sm:$0xff]
        %v384 = vld [vmem:[#allocation3 + $0x8] sm:$0xff]
        %v385 = vsub.f32 %v375, %v381
        %v386 = vsub.f32 %v376, %v382
        %v387 = vmul.f32 %v385, 1.442695
        %v388 = vpow.pop %v387
        %v389 = vmul.f32 %v386, 1.442695
        %v390 = vpow.pop %v389
        %v391 = vmul.f32 %v383, %v388
        %v392 = vmul.f32 %v384, %v390
        %394 = vset.pattern.permute.xlu0 0
        %395 = vperm.xlu0 %394, %v381
        %v396 = vpop.permute.xlu0 %395
        %399 = vset.pattern.permute.xlu0 0
        %400 = vperm.xlu0 %399, %v382
        %v401 = vpop.permute.xlu0 %400
        %v403 = vsub.f32 %v339, %v396
        %v404 = vsub.f32 %v341, %v401
        %v405 = vmul.f32 %v403, 1.442695
        %v406 = vpow.pop %v405
        %v407 = vmul.f32 %v404, 1.442695
        %v408 = vpow.pop %v407
        %409 = vadd.xlane.f32.xlu0 %v406
        %v410 = vpop.xlane.xlu0 %409
        %411 = vadd.xlane.f32.xlu0 %v408
        %v412 = vpop.xlane.xlu0 %411
        %v413 = vadd.f32 %v391, %v410
        %v414 = vadd.f32 %v392, %v412
        %415 = vst.msk [vmem:[#allocation3] sm:$0xff] %vm372, %v413
        %416 = vst.msk [vmem:[#allocation3 + $0x8] sm:$0xff] %vm372, %v414
        %417 = vst.msk [vmem:[#allocation2] sm:$0xff] %vm372, %v381
        %418 = vst.msk [vmem:[#allocation2 + $0x8] sm:$0xff] %vm372, %v382
        %p419 = scmp.eq.s32.totalorder %s24, 2
        // Predicated region
        $region41: #{tpu_custom_call.1} parent=31 // pred_check
          %p420 = pneg %p419
        $region42: #{tpu_custom_call.1} parent=31 // pred_check_branch
          %422 = sbr.rel (%p420) target = $region44
        $region43: #{tpu_custom_call.1} parent=31 // pred_region
          %v423 = vld [vmem:[#allocation4] sm:$0xff]
          %v424 = vld [vmem:[#allocation4 + $0x8] sm:$0xff]
          %v425 = vld [vmem:[#allocation2] sm:$0xff]
          %v426 = vld [vmem:[#allocation2 + $0x8] sm:$0xff]
          %v427 = vsub.f32 %v423, %v425
          %v428 = vsub.f32 %v424, %v426
          %v429 = vld [vmem:[#allocation3] sm:$0xff]
          %v430 = vld [vmem:[#allocation3 + $0x8] sm:$0xff]
          %v431 = vlog2.pop %v429
          %v432 = vmul.f32 %v431, 0.6931472
          %v433 = vlog2.pop %v430
          %v434 = vmul.f32 %v433, 0.6931472
          %v435 = vsub.f32 %v427, %v432
          %v436 = vsub.f32 %v428, %v434
          %v437 = vld [vmem:[%s276] sm:$0xff]
          %v438 = vld [vmem:[%s276 + $0x8] sm:$0xff]
          %441 = vrot.lane.b32.xlu0 %v437, 127
          %v442 = vpop.permute.xlu0 %441
          %443 = vrot.lane.b32.xlu0 %v438, 127
          %v444 = vpop.permute.xlu0 %443
          %v447 = vsub.f32 %v435, %v442
          %v448 = vsub.f32 %v436, %v444
          %v449 = vmul.f32 %v447, 1.442695
          %v450 = vpow.pop %v449
          %v451 = vmul.f32 %v448, 1.442695
          %v452 = vpow.pop %v451
          %v453 = vmax.f32 %v450, 0.9
          %v454 = vmax.f32 %v452, 0.9
          %v455 = vmin.f32 %v453, 1.1
          %v456 = vmin.f32 %v454, 1.1
          %457 = vrot.lane.b32.xlu0 %v437, 125
          %v458 = vpop.permute.xlu0 %457
          %459 = vrot.lane.b32.xlu0 %v438, 125
          %v460 = vpop.permute.xlu0 %459
          %v463 = vmul.f32 %v450, %v458
          %v464 = vmul.f32 %v452, %v460
          %v465 = vmul.f32 %v455, %v458
          %v466 = vmul.f32 %v456, %v460
          %v467 = vmin.f32 %v463, %v465
          %v468 = vmin.f32 %v464, %v466
          %469 = vst.msk [vmem:[%s282] sm:$0xff] %vm372, %v467
          %470 = vst.msk [vmem:[%s282 + $0x8] sm:$0xff] %vm372, %v468
          %473 = vrot.lane.b32.xlu0 %v435, 2
          %v474 = vpop.permute.xlu0 %473
          %475 = vrot.lane.b32.xlu0 %v436, 2
          %v476 = vpop.permute.xlu0 %475
          %v479 = vsub.f32 %v437, %v474
          %v480 = vsub.f32 %v438, %v476
          %v481 = vmul.f32 %v479, 1.442695
          %v482 = vpow.pop %v481
          %v483 = vmul.f32 %v480, 1.442695
          %v484 = vpow.pop %v483
          %v485 = vsub.f32 %v482, 1.0
          %v486 = vsub.f32 %v484, 1.0
          %v487 = vsub.f32 %v485, %v437
          %v488 = vsub.f32 %v486, %v438
          %v489 = vadd.f32 %v487, %v474
          %v490 = vadd.f32 %v488, %v476
          %493 = vrot.lane.b32.xlu0 %v489, 126
          %v494 = vpop.permute.xlu0 %493
          %495 = vrot.lane.b32.xlu0 %v490, 126
          %v496 = vpop.permute.xlu0 %495
          %499 = vst.msk [vmem:[%s288] sm:$0xff] %vm372, %v494
          %500 = vst.msk [vmem:[%s288 + $0x8] sm:$0xff] %vm372, %v496
        $region44: #{tpu_custom_call.1} parent=31 // pred_fallthru
          _
        %s501 = smul.u32 2, %s23
        %p502 = scmp.lt.s32.totalorder %s501, 3
        %s503 = scalar_select %p502, %s501, 3
        %s504 = smul.addr %s503, 8
        %s505 = scalar_lea.vmem %s3, %s504
        %s506 = smul.u32 2, %s23
        %p507 = scmp.lt.s32.totalorder %s506, 3
        %s508 = scalar_select %p507, %s506, 3
        %s509 = smul.addr %s508, 8
        %s510 = scalar_lea.vmem %s4, %s509
        // Predicated region
        $region45: #{tpu_custom_call.1} parent=31 // pred_check
          %p511 = pneg %p127
        $region46: #{tpu_custom_call.1} parent=31 // pred_check_branch
          %513 = sbr.rel (%p511) target = $region48
        $region47: #{tpu_custom_call.1} parent=31 // pred_region
          %s514 = smul.u32 2, %s23
        $region48: #{tpu_custom_call.1} parent=31 // pred_fallthru
          _
        // Predicated region
        $region49: #{tpu_custom_call.1} parent=31 // pred_check
          %p515 = pneg %p153
        $region50: #{tpu_custom_call.1} parent=31 // pred_check_branch
          %517 = sbr.rel (%p515) target = $region52
        $region51: #{tpu_custom_call.1} parent=31 // pred_region
          %s518 = smul.u32 2, %s23
        $region52: #{tpu_custom_call.1} parent=31 // pred_fallthru
          _
      $region32: #{tpu_custom_call.1} parent=5 // pred_fallthru
        _
      %p519 = scmp.le.s32.totalorder 2, %s14
      // Predicated region
      $region53: #{tpu_custom_call.1} parent=5 // pred_check
        %p520 = pneg %p519
      $region54: #{tpu_custom_call.1} parent=5 // pred_check_branch
        %522 = sbr.rel (%p520) target = $region56
      $region55: #{tpu_custom_call.1} parent=5 // pred_region
        %s523 = ssub.s32 %s14, 2
        // Predicated region
        $region57: #{tpu_custom_call.1} parent=55 // pred_check
          %p524 = pneg %p133
        $region58: #{tpu_custom_call.1} parent=55 // pred_check_branch
          %526 = sbr.rel (%p524) target = $region60
        $region59: #{tpu_custom_call.1} parent=55 // pred_region
          %s527 = smul.u32 2, %s25
          %p528 = scmp.lt.s32.totalorder %s527, 3
          %s529 = scalar_select %p528, %s527, 3
          %s530 = smul.addr %s529, 8
          %s531 = scalar_lea.vmem %s3, %s530
        $region60: #{tpu_custom_call.1} parent=55 // pred_fallthru
          _
        // Predicated region
        $region61: #{tpu_custom_call.1} parent=55 // pred_check
          %p532 = pneg %p159
        $region62: #{tpu_custom_call.1} parent=55 // pred_check_branch
          %534 = sbr.rel (%p532) target = $region64
        $region63: #{tpu_custom_call.1} parent=55 // pred_region
          %s535 = smul.u32 2, %s25
          %p536 = scmp.lt.s32.totalorder %s535, 3
          %s537 = scalar_select %p536, %s535, 3
          %s538 = smul.addr %s537, 8
          %s539 = scalar_lea.vmem %s4, %s538
        $region64: #{tpu_custom_call.1} parent=55 // pred_fallthru
          _
      $region56: #{tpu_custom_call.1} parent=5 // pred_fallthru
        _
    $region6: #{tpu_custom_call.1} parent=1 // loop_footer
      %s18 = sadd.s32 1, %s14
    $region7: #{tpu_custom_call.1} parent=1 // loop_footer_branch
      %13 = sbr.rel target = $region3
    $region8: #{tpu_custom_call.1} parent=1 // loop_exit
      _
    %540 = vsyncpa [#allocation6], 1
    %s541 = scalar_lea.sflag [#allocation6], 1
    %542 = vsyncpa %s541, 1

</llo_original>
